<compile_context>
chip_gen: v7x
topology: tpu7x:2x2x1
jax: 0.10.0
libtpu: 0.0.40
codegen_flags: <defaults>
</compile_context>

<pallas_src>
import jax
import jax.numpy as jnp
from jax.experimental import pallas as pl
from jax.experimental.pallas import tpu as pltpu


def _chomp_kernel(x_ref, o_ref):
    # Tiled path: input/output tiles have identical shapes -> pure copy.
    # Fallback path (L_out < 128): input tile carries all L columns -> slice.
    l_out = o_ref.shape[-1]
    if x_ref.shape[-1] == l_out:
        o_ref[...] = x_ref[...]
    else:
        o_ref[...] = x_ref[:, :l_out]


def _round_up(x: int, m: int) -> int:
    return -(-x // m) * m


def chomp1d(x: jax.Array, size: int, *, tr_max: int = 512, tl_max: int = 2048) -> jax.Array:
    """Pallas equivalent of Chomp1d(size)(x) for x of shape (N, C, L)."""
    N, C, L = x.shape
    if size == 0:
        # Literal PyTorch x[:, :, :-0] is empty; TCNs never construct Chomp1d(0).
        return x[:, :, :0]
    assert 0 < size < L, "chomp size must be in (0, L)"
    L_out = L - size
    R = N * C

    itemsize = jnp.dtype(x.dtype).itemsize
    sub = max(8, 8 * (4 // max(1, itemsize)))  # sublane packing: 8 f32, 16 bf16, 32 int8

    # Free contiguous reshape: merge batch into the row axis.
    x2 = x.reshape(R, L)

    # ---- lane (column) tiling -------------------------------------------------
    if L_out >= 128:
        tl_out = min(tl_max, (L_out // 128) * 128)  # lane-dense, never reads the tail
        tl_in = tl_out
    else:
        # Tiny L_out: full-extent blocks (always legal), slice inside the kernel.
        tl_out = L_out
        tl_in = L
    n_l = pl.cdiv(L_out, tl_out)

    # ---- row tiling (balanced tail; >=2 grid blocks for v7x dual TC) ----------
    n_r = max(1, pl.cdiv(R, tr_max))
    if n_r * n_l < 2 and R >= 2 * sub:
        n_r = 2  # give the parallel grid at least two blocks
    if R < sub:
        tr = R  # full extent along rows -> always a legal block shape
    else:
        tr = _round_up(pl.cdiv(R, n_r), sub)
        if tr >= R:
            tr = R
    n_r = pl.cdiv(R, tr)

    grid = (n_r, n_l)

    # ---- VMEM budget: in + out tiles, double-buffered, plus slack -------------
    need = 2 * tr * (tl_in + tl_out) * itemsize
    vmem_limit = int(min(32 * 1024 * 1024, max(need + 2 * 1024 * 1024, 16 * 1024 * 1024)))

    out2 = pl.pallas_call(
        _chomp_kernel,
        out_shape=jax.ShapeDtypeStruct((R, L_out), x.dtype),
        grid_spec=pltpu.PrefetchScalarGridSpec(
            num_scalar_prefetch=0,
            grid=grid,
            in_specs=[pl.BlockSpec((tr, tl_in), lambda r, l: (r, l))],
            out_specs=pl.BlockSpec((tr, tl_out), lambda r, l: (r, l)),
        ),
        compiler_params=pltpu.CompilerParams(
            dimension_semantics=("parallel", "parallel"),
            vmem_limit_bytes=vmem_limit,
        ),
    )(x2)

    return out2.reshape(N, C, L_out)


if __name__ == "__main__":
    key = jax.random.PRNGKey(0)

    # 1) Small shapes consistent with the module's NCL convention (fallback path).
    N, C, L = 2, 4, 16
    size = 3  # chomp amount (== causal padding of a TCN conv)
    x = jax.random.normal(key, (N, C, L), dtype=jnp.float32)
    out = jax.block_until_ready(chomp1d(x, size))
    ref = x[:, :, :-size]
    assert out.shape == (N, C, L - size), out.shape
    assert out.dtype == x.dtype
    assert jnp.array_equal(out, ref), "mismatch vs reference slice (small)"

    # 2) Tiled lane-dense path with unaligned L_out and edge blocks (bf16).
    N2, C2, L2, size2 = 2, 36, 784, 7
    x2 = jax.random.normal(jax.random.PRNGKey(1), (N2, C2, L2), dtype=jnp.bfloat16)
    out2 = jax.block_until_ready(chomp1d(x2, size2))
    assert jnp.array_equal(out2, x2[:, :, :-size2]), "mismatch on tiled path"

    # 3) Multi-block rows (R > tr_max) + multi-block columns, balanced tail blocks.
    N3, C3, L3, size3 = 4, 160, 1536, 5
    x3 = jax.random.normal(jax.random.PRNGKey(2), (N3, C3, L3), dtype=jnp.float32)
    out3 = jax.block_until_ready(chomp1d(x3, size3))
    assert jnp.array_equal(out3, x3[:, :, :-size3]), "mismatch on multi-block path"

    print("KERNEL_OK")
</pallas_src>

<mosaic_0001>
module attributes {stable_mosaic.version = 11 : i64} {
  func.func @_chomp_kernel(%arg0: i32, %arg1: i32, %arg2: memref<8x16xf32, #tpu.memory_space<vmem>>, %arg3: memref<8x13xf32, #tpu.memory_space<vmem>>) attributes {dimension_semantics = [#tpu.dimension_semantics<parallel>, #tpu.dimension_semantics<parallel>], iteration_bounds = array<i64: 1, 1>, scalar_prefetch = 0 : i64, scratch_operands = 0 : i64, tpu.core_type = #tpu.core_type<tc>, window_params = [{transform_indices = @transform_0, window_bounds = array<i64: 8, 16>}, {transform_indices = @transform_1, window_bounds = array<i64: 8, 13>}]} {
    %c0 = arith.constant 0 : index
    %c0_0 = arith.constant 0 : index
    %0 = vector.load %arg2[%c0, %c0_0] : memref<8x16xf32, #tpu.memory_space<vmem>>, vector<8x13xf32>
    %c0_1 = arith.constant 0 : index
    %c0_2 = arith.constant 0 : index
    %1 = vector.load %arg3[%c0_1, %c0_2] : memref<8x13xf32, #tpu.memory_space<vmem>>, vector<8x13xf32>
    tpu.vector_store %arg3[%c0_1, %c0_2], %0 {strides = array<i32>} : memref<8x13xf32, #tpu.memory_space<vmem>>, vector<8x13xf32>,
    return
  }
  func.func @transform_0(%arg0: i32, %arg1: i32) -> (i32, i32) {
    %c0_i32 = arith.constant 0 : i32
    return %arg0, %arg1 : i32, i32
  }
  func.func @transform_1(%arg0: i32, %arg1: i32) -> (i32, i32) {
    %c0_i32 = arith.constant 0 : i32
    return %arg0, %arg1 : i32, i32
  }
}

</mosaic_0001>

<llo_original>
// kernel: tpu_custom_call.1
$region0: #{tpu_custom_call.1}
  #allocation0 [shape = 'u32[]', space=smem, size = 0x4, offset = 0x4, fixed_abs, tag = 'smem constant byte address 0x4 - core index']
  #allocation1 [shape = 'u32[144,128]{1,0:T(1,128)}', space=vmem, size = 0x12000, scoped, tag = 'internal scratch']
  %s0 = inlined_call_operand.hbm [shape: f32[8,16], index: 0, kind: input, shape index: {}]
  %s1 = inlined_call_operand.hbm [shape: f32[8,13], index: 1, kind: output, shape index: {}]
  %s2 = sld [smem:[#allocation0]]
  $region18: #{tpu_custom_call.1} parent=0
    _
  %s4 = ssub.s32 1, %s2
  %s5 = scalar_select 0, %s4, %s2
  $region1: #{tpu_custom_call.1} parent=0
    #allocation2 [shape = 'u8[4096]{0}', space=vmem, size = 0x1000, scoped, tag = 'input window, operand 0, single buffered']
    #allocation3 [shape = 's32[1]{0}', space=sflag, size = 0x4, scoped, tag = 'scoped memory for tpu_custom_call.1']
    #allocation4 [shape = 's32[1]{0}', space=sflag, size = 0x4, scoped, tag = 'scoped memory for tpu_custom_call.1']
    #allocation5 [shape = 'u8[4096]{0}', space=vmem, size = 0x1000, scoped, tag = 'output window, operand 0, single buffered']
    %6 = vsyncpa [#allocation3], 0
    %7 = vsyncpa [#allocation4], 0
    // Predicated region
    $region2: #{tpu_custom_call.1} parent=1 // pred_check
      _
    $region3: #{tpu_custom_call.1} parent=1 // pred_check_branch
      %9 = sbr.rel (0) target = $region5
    $region4: #{tpu_custom_call.1} parent=1 // pred_region
      %s11 = ssub.s32 128, 128
      %12 = vsyncadd [#allocation3], %s11
      %s14 = sshll.u32 [#allocation2], 4
      %s15 = int_to_ptr.vmem [resolvable:$true] %s14
      %17 = dma.hbm_to_vmem [thread:$0]  %s0, 128, %s15, [#allocation3]
    $region5: #{tpu_custom_call.1} parent=1 // pred_fallthru
      _
    // Predicated region
    $region6: #{tpu_custom_call.1} parent=1 // pred_check
      _
    $region7: #{tpu_custom_call.1} parent=1 // pred_check_branch
      %19 = sbr.rel (0) target = $region9
    $region8: #{tpu_custom_call.1} parent=1 // pred_region
      %20 = dma.done [#allocation3], 128
    $region9: #{tpu_custom_call.1} parent=1 // pred_fallthru
      _
    %v21 = vld [vmem:[#allocation2] sm:$0xff]
    %vm22 = vcmask 105472
    %23 = vst.msk [vmem:[#allocation5] sm:$0xff] %vm22, %v21
    // Predicated region
    $region10: #{tpu_custom_call.1} parent=1 // pred_check
      _
    $region11: #{tpu_custom_call.1} parent=1 // pred_check_branch
      %25 = sbr.rel (0) target = $region13
    $region12: #{tpu_custom_call.1} parent=1 // pred_region
      %s27 = ssub.s32 128, 128
      %28 = vsyncadd [#allocation4], %s27
      %s30 = sshll.u32 [#allocation5], 4
      %s31 = int_to_ptr.vmem [resolvable:$true] %s30
      %33 = dma.vmem_to_hbm [thread:$0]  %s31, 128, %s1, [#allocation4]
    $region13: #{tpu_custom_call.1} parent=1 // pred_fallthru
      _
    // Predicated region
    $region14: #{tpu_custom_call.1} parent=1 // pred_check
      _
    $region15: #{tpu_custom_call.1} parent=1 // pred_check_branch
      %35 = sbr.rel (0) target = $region17
    $region16: #{tpu_custom_call.1} parent=1 // pred_region
      %36 = dma.done [#allocation4], 128
    $region17: #{tpu_custom_call.1} parent=1 // pred_fallthru
      _
    %37 = vsyncpa [#allocation3], 1
    %38 = vsyncpa [#allocation4], 1

</llo_original>
